<compile_context>
chip_gen: v5e
topology: v5e:2x2
jax: 0.10.0
libtpu: 0.0.40
codegen_flags: <defaults>
</compile_context>

<pallas_src>
import functools

import jax
import jax.numpy as jnp
from jax.experimental import pallas as pl
from jax.experimental.pallas import tpu as pltpu


# ---------------------------------------------------------------------------
# Pass 1: conv tile (single MXU matmul) + per-tile BN partial statistics
# ---------------------------------------------------------------------------
def _conv_stats_kernel(slab_ref, w_ref, y_ref, sum_ref, sq_ref):
    # slab_ref: (1, KC, HWT)  -- HW tile on the lane axis (lane-dense)
    # w_ref   : (Cout, KC)
    acc = jnp.dot(w_ref[...], slab_ref[0],
                  preferred_element_type=jnp.float32)          # (Cout, HWT) f32
    y_ref[0] = acc                                             # lane-dense store
    sum_ref[0, 0] = jnp.sum(acc, axis=-1, keepdims=True)       # (Cout, 1)
    sq_ref[0, 0] = jnp.sum(acc * acc, axis=-1, keepdims=True)  # (Cout, 1)


# ---------------------------------------------------------------------------
# Pass 2: reduce partial stats + normalize each tile (still lane-dense)
# ---------------------------------------------------------------------------
def _bn_kernel(y_ref, sum_ref, sq_ref, gamma_ref, beta_ref, out_ref, *, count, eps):
    inv_cnt = 1.0 / count
    mean = jnp.sum(sum_ref[...], axis=(0, 1)) * inv_cnt               # (Cout, 1)
    var = jnp.sum(sq_ref[...], axis=(0, 1)) * inv_cnt - mean * mean   # biased var (f32)
    inv = jax.lax.rsqrt(var + eps)
    scale = inv * gamma_ref[...]                                      # (Cout, 1)
    shift = beta_ref[...] - mean * scale
    out_ref[0] = (y_ref[0] * scale + shift).astype(out_ref.dtype)


def _choose_hw_tile(hw, max_tile=2048):
    """Largest divisor of hw that is a multiple of 128 and <= max_tile (else hw)."""
    if hw % 128 != 0:
        return hw
    t = min(max_tile, hw)
    t -= t % 128
    while t >= 128:
        if hw % t == 0:
            return t
        t -= 128
    return hw


def conv2d_batchnorm(x_nchw, weight_oihw, bias, gamma, beta,
                     *, stride, padding, eps=1e-5):
    N, Cin, H, W = x_nchw.shape
    Cout, Cin_w, KH, KW = weight_oihw.shape
    assert Cin == Cin_w
    Ho = (H + 2 * padding - KH) // stride + 1
    Wo = (W + 2 * padding - KW) // stride + 1
    HW = Ho * Wo
    KC = KH * KW * Cin

    # Conv bias cancels exactly under the BN mean subtraction -> not needed for the
    # forward output (only the unmodeled running-stat buffers would see it).
    del bias

    # ---- glue: im2col slab (N, KC, HW) with HW on the lane axis; weight (Cout, KC)
    xp = jnp.pad(x_nchw, ((0, 0), (0, 0), (padding, padding), (padding, padding)))
    span_h = (Ho - 1) * stride + 1
    span_w = (Wo - 1) * stride + 1
    taps = []
    for kh in range(KH):
        for kw in range(KW):
            taps.append(xp[:, :, kh:kh + span_h:stride, kw:kw + span_w:stride])
    slab = jnp.stack(taps, axis=1).reshape(N, KC, HW).astype(jnp.float32)
    wmat = jnp.transpose(weight_oihw, (0, 2, 3, 1)).reshape(Cout, KC).astype(jnp.float32)

    HWT = _choose_hw_tile(HW)
    T = HW // HWT
    grid = (N, T)

    # Explicit scoped-VMEM budget: double-buffered blocks + weights/stats, with slack.
    step_bytes = 4 * (KC * HWT + Cout * KC + 2 * Cout * HWT + 8 * Cout)
    vmem_limit = int(min(max(8 * step_bytes, 16 << 20), 48 << 20))
    cparams = pltpu.CompilerParams(
        dimension_semantics=("parallel", "parallel"),
        vmem_limit_bytes=vmem_limit)

    # ---- pass 1: conv + partial BN stats --------------------------------------
    y_conv, psum, psq = pl.pallas_call(
        _conv_stats_kernel,
        grid=grid,
        in_specs=[
            pl.BlockSpec((1, KC, HWT), lambda n, t: (n, 0, t)),
            pl.BlockSpec((Cout, KC), lambda n, t: (0, 0)),
        ],
        out_specs=[
            pl.BlockSpec((1, Cout, HWT), lambda n, t: (n, 0, t)),
            pl.BlockSpec((1, 1, Cout, 1), lambda n, t: (n, t, 0, 0)),
            pl.BlockSpec((1, 1, Cout, 1), lambda n, t: (n, t, 0, 0)),
        ],
        out_shape=[
            jax.ShapeDtypeStruct((N, Cout, HW), jnp.float32),
            jax.ShapeDtypeStruct((N, T, Cout, 1), jnp.float32),
            jax.ShapeDtypeStruct((N, T, Cout, 1), jnp.float32),
        ],
        compiler_params=cparams,
    )(slab, wmat)

    # ---- pass 2: normalize with global batch statistics -----------------------
    bn = functools.partial(_bn_kernel, count=float(N * HW), eps=eps)
    out_flat = pl.pallas_call(
        bn,
        grid=grid,
        in_specs=[
            pl.BlockSpec((1, Cout, HWT), lambda n, t: (n, 0, t)),
            pl.BlockSpec((N, T, Cout, 1), lambda n, t: (0, 0, 0, 0)),
            pl.BlockSpec((N, T, Cout, 1), lambda n, t: (0, 0, 0, 0)),
            pl.BlockSpec((Cout, 1), lambda n, t: (0, 0)),
            pl.BlockSpec((Cout, 1), lambda n, t: (0, 0)),
        ],
        out_specs=pl.BlockSpec((1, Cout, HWT), lambda n, t: (n, 0, t)),
        out_shape=jax.ShapeDtypeStruct((N, Cout, HW), x_nchw.dtype),
        compiler_params=cparams,
    )(y_conv, psum, psq,
      gamma.reshape(Cout, 1).astype(jnp.float32),
      beta.reshape(Cout, 1).astype(jnp.float32))

    # glue: (N, Cout, Ho*Wo) -> NCHW (pure reshape, no transpose needed)
    return out_flat.reshape(N, Cout, Ho, Wo)


def reference(x_nchw, weight_oihw, bias, gamma, beta, *, stride, padding, eps=1e-5):
    out = jax.lax.conv_general_dilated(
        x_nchw, weight_oihw,
        window_strides=(stride, stride),
        padding=[(padding, padding), (padding, padding)],
        dimension_numbers=("NCHW", "OIHW", "NCHW"))
    out = out + bias[None, :, None, None]
    mean = out.mean(axis=(0, 2, 3), keepdims=True)
    var = out.var(axis=(0, 2, 3), keepdims=True)  # biased, matches BN normalization
    return ((out - mean) / jnp.sqrt(var + eps)
            * gamma[None, :, None, None] + beta[None, :, None, None])


if __name__ == "__main__":
    # conv2DBatchNorm(in_channels=4, n_filters=8, k_size=3, stride=1, padding=1, bias=True)
    N, Cin, H, W = 2, 4, 16, 16
    Cout, K, stride, padding = 8, 3, 1, 1

    key = jax.random.PRNGKey(0)
    kx, kw, kb, kg, kbeta = jax.random.split(key, 5)
    x = jax.random.normal(kx, (N, Cin, H, W), jnp.float32)
    weight = jax.random.normal(kw, (Cout, Cin, K, K), jnp.float32) * 0.1
    bias = jax.random.normal(kb, (Cout,), jnp.float32) * 0.1
    gamma = 1.0 + 0.1 * jax.random.normal(kg, (Cout,), jnp.float32)
    beta = 0.1 * jax.random.normal(kbeta, (Cout,), jnp.float32)

    out = conv2d_batchnorm(x, weight, bias, gamma, beta,
                           stride=stride, padding=padding)
    out = jax.block_until_ready(out)

    ref = reference(x, weight, bias, gamma, beta, stride=stride, padding=padding)
    assert out.shape == ref.shape == (N, Cout, H, W)
    err = float(jnp.max(jnp.abs(out - ref)))
    assert jnp.allclose(out, ref, atol=1e-3, rtol=1e-3), err

    print("KERNEL_OK")
</pallas_src>

<mosaic_0001>
module attributes {stable_mosaic.version = 11 : i64} {
  func.func @_conv_stats_kernel(%arg0: i32, %arg1: i32, %arg2: memref<1x36x256xf32, #tpu.memory_space<vmem>>, %arg3: memref<8x36xf32, #tpu.memory_space<vmem>>, %arg4: memref<1x8x256xf32, #tpu.memory_space<vmem>>, %arg5: memref<1x1x8x1xf32, #tpu.memory_space<vmem>>, %arg6: memref<1x1x8x1xf32, #tpu.memory_space<vmem>>) attributes {dimension_semantics = [#tpu.dimension_semantics<parallel>, #tpu.dimension_semantics<parallel>], iteration_bounds = array<i64: 2, 1>, scalar_prefetch = 0 : i64, scratch_operands = 0 : i64, tpu.core_type = #tpu.core_type<tc>, window_params = [{transform_indices = @transform_0, window_bounds = array<i64: 1, 36, 256>}, {pipeline_mode = #tpu.pipeline_mode<synchronous>, transform_indices = @transform_1, window_bounds = array<i64: 8, 36>}, {transform_indices = @transform_2, window_bounds = array<i64: 1, 8, 256>}, {transform_indices = @transform_3, window_bounds = array<i64: 1, 1, 8, 1>}, {transform_indices = @transform_4, window_bounds = array<i64: 1, 1, 8, 1>}]} {
    %c0 = arith.constant 0 : index
    %c0_0 = arith.constant 0 : index
    %0 = vector.load %arg3[%c0, %c0_0] : memref<8x36xf32, #tpu.memory_space<vmem>>, vector<8x36xf32>
    %c0_1 = arith.constant 0 : index
    %c0_2 = arith.constant 0 : index
    %c0_3 = arith.constant 0 : index
    %1 = vector.load %arg2[%c0_1, %c0_2, %c0_3] : memref<1x36x256xf32, #tpu.memory_space<vmem>>, vector<1x36x256xf32>
    %2 = vector.shape_cast %1 : vector<1x36x256xf32> to vector<36x256xf32>
    %cst = arith.constant dense<0.000000e+00> : vector<8x256xf32>
    %3 = tpu.matmul %0, %2, %cst {dimension_numbers = #tpu.dot_dimension_numbers<[1], [0], [0], [1], [0, 0, 1, 1], [], []>} : vector<8x36xf32>, vector<36x256xf32>, vector<8x256xf32> -> vector<8x256xf32>
    %c0_4 = arith.constant 0 : index
    %c0_5 = arith.constant 0 : index
    %c0_6 = arith.constant 0 : index
    %4 = vector.load %arg4[%c0_4, %c0_5, %c0_6] : memref<1x8x256xf32, #tpu.memory_space<vmem>>, vector<1x8x256xf32>
    %5 = vector.shape_cast %4 : vector<1x8x256xf32> to vector<8x256xf32>
    %6 = vector.shape_cast %3 : vector<8x256xf32> to vector<1x8x256xf32>
    tpu.vector_store %arg4[%c0_4, %c0_5, %c0_6], %6 {strides = array<i32>} : memref<1x8x256xf32, #tpu.memory_space<vmem>>, vector<1x8x256xf32>,
    %cst_7 = arith.constant dense<0.000000e+00> : vector<8xf32>
    %7 = vector.multi_reduction <add>, %3, %cst_7 [1] : vector<8x256xf32> to vector<8xf32>
    %8 = vector.shape_cast %7 : vector<8xf32> to vector<8x1xf32>
    %c0_8 = arith.constant 0 : index
    %c0_9 = arith.constant 0 : index
    %c0_10 = arith.constant 0 : index
    %c0_11 = arith.constant 0 : index
    %9 = vector.load %arg5[%c0_8, %c0_9, %c0_10, %c0_11] : memref<1x1x8x1xf32, #tpu.memory_space<vmem>>, vector<1x1x8x1xf32>
    %10 = vector.shape_cast %9 : vector<1x1x8x1xf32> to vector<8x1xf32>
    %11 = vector.shape_cast %8 : vector<8x1xf32> to vector<1x1x8x1xf32>
    tpu.vector_store %arg5[%c0_8, %c0_9, %c0_10, %c0_11], %11 {strides = array<i32>} : memref<1x1x8x1xf32, #tpu.memory_space<vmem>>, vector<1x1x8x1xf32>,
    %12 = arith.mulf %3, %3 : vector<8x256xf32>
    %cst_12 = arith.constant dense<0.000000e+00> : vector<8xf32>
    %13 = vector.multi_reduction <add>, %12, %cst_12 [1] : vector<8x256xf32> to vector<8xf32>
    %14 = vector.shape_cast %13 : vector<8xf32> to vector<8x1xf32>
    %c0_13 = arith.constant 0 : index
    %c0_14 = arith.constant 0 : index
    %c0_15 = arith.constant 0 : index
    %c0_16 = arith.constant 0 : index
    %15 = vector.load %arg6[%c0_13, %c0_14, %c0_15, %c0_16] : memref<1x1x8x1xf32, #tpu.memory_space<vmem>>, vector<1x1x8x1xf32>
    %16 = vector.shape_cast %15 : vector<1x1x8x1xf32> to vector<8x1xf32>
    %17 = vector.shape_cast %14 : vector<8x1xf32> to vector<1x1x8x1xf32>
    tpu.vector_store %arg6[%c0_13, %c0_14, %c0_15, %c0_16], %17 {strides = array<i32>} : memref<1x1x8x1xf32, #tpu.memory_space<vmem>>, vector<1x1x8x1xf32>,
    return
  }
  func.func @transform_0(%arg0: i32, %arg1: i32) -> (i32, i32, i32) {
    %c0_i32 = arith.constant 0 : i32
    %c0_i32_0 = arith.constant 0 : i32
    return %arg0, %c0_i32, %arg1 : i32, i32, i32
  }
  func.func @transform_1(%arg0: i32, %arg1: i32) -> (i32, i32) {
    %c0_i32 = arith.constant 0 : i32
    %c0_i32_0 = arith.constant 0 : i32
    %c0_i32_1 = arith.constant 0 : i32
    return %c0_i32, %c0_i32_0 : i32, i32
  }
  func.func @transform_2(%arg0: i32, %arg1: i32) -> (i32, i32, i32) {
    %c0_i32 = arith.constant 0 : i32
    %c0_i32_0 = arith.constant 0 : i32
    return %arg0, %c0_i32, %arg1 : i32, i32, i32
  }
  func.func @transform_3(%arg0: i32, %arg1: i32) -> (i32, i32, i32, i32) {
    %c0_i32 = arith.constant 0 : i32
    %c0_i32_0 = arith.constant 0 : i32
    %c0_i32_1 = arith.constant 0 : i32
    return %arg0, %arg1, %c0_i32, %c0_i32_0 : i32, i32, i32, i32
  }
  func.func @transform_4(%arg0: i32, %arg1: i32) -> (i32, i32, i32, i32) {
    %c0_i32 = arith.constant 0 : i32
    %c0_i32_0 = arith.constant 0 : i32
    %c0_i32_1 = arith.constant 0 : i32
    return %arg0, %arg1, %c0_i32, %c0_i32_0 : i32, i32, i32, i32
  }
}

</mosaic_0001>

<llo_original>
// kernel: tpu_custom_call.1
$region0: #{tpu_custom_call.1}
  #allocation0 [shape = 'u32[]', space=smem, size = 0x4, offset = 0x4, fixed_abs, tag = 'smem constant byte address 0x4 - core index']
  #allocation1 [shape = 'u32[72,128]{1,0:T(1,128)}', space=vmem, size = 0x9000, scoped, tag = 'internal scratch']
  %s0 = inlined_call_operand.vmem [shape: f32[2,36,256], index: 0, kind: input, shape index: {}]
  %s1 = inlined_call_operand.vmem [shape: f32[8,36], index: 1, kind: input, shape index: {}]
  %s2 = inlined_call_operand.hbm [shape: f32[2,8,256], index: 2, kind: output, shape index: {0}]
  %s3 = inlined_call_operand.vmem [shape: f32[2,1,8,1], index: 3, kind: output, shape index: {1}]
  %s4 = inlined_call_operand.vmem [shape: f32[2,1,8,1], index: 4, kind: output, shape index: {2}]
  %5 = xla_tuple %s2, %s3, %s4
  %s6 = sld [smem:[#allocation0]]
  $region57: #{tpu_custom_call.1} parent=0
    _
  %s8 = ssub.s32 1, %s6
  %s9 = scalar_select 0, %s8, %s6
  $region1: #{tpu_custom_call.1} parent=0
    #allocation2 [shape = 'u8[16384]{0}', space=vmem, size = 0x4000, scoped, tag = 'output window, operand 0']
    #allocation3 [shape = 's32[2]{0}', space=sflag, size = 0x8, scoped, tag = 'scoped memory for tpu_custom_call.1']
    %10 = vsyncpa [#allocation3], 0
    %s11 = scalar_lea.sflag [#allocation3], 1
    %12 = vsyncpa %s11, 0
    loop: start=0, step=1, limit=4
    $region2: #{tpu_custom_call.1} parent=1 // loop_pre_header
      _
    $region3: #{tpu_custom_call.1} parent=1 // loop_header
      %s14 = sphi 0, %s18
      %p15 = scmp.ge.s32.totalorder %s14, 4
      %s21 = sphi 0, %s33
      %s22 = sphi 0, %s29
      %s23 = sphi 0, %s21
      %s24 = sphi 0, %s22
      %s25 = sphi 0, %s23
      %s26 = sphi 0, %s24
      %s38 = sphi 0, %s40
      %s41 = sphi 0, %s38
      %s42 = sphi 0, %s41
      %s58 = sphi 0, %s42
      %s62 = sphi 0, %s62
      %s64 = sphi 0, %s62
      %s65 = sphi 0, %s64
      %s79 = sphi 0, %s65
      %s87 = sphi 0, %s89
      %s90 = sphi 0, %s87
      %s91 = sphi 0, %s90
      %s107 = sphi 0, %s91
      %s115 = sphi 0, %s117
      %s118 = sphi 0, %s115
      %s119 = sphi 0, %s118
      %s135 = sphi 0, %s119
      %s143 = sphi 0, %s145
      %s146 = sphi 0, %s143
      %s147 = sphi 0, %s146
      %s163 = sphi 0, %s147
    $region4: #{tpu_custom_call.1} parent=1 // loop_header_branch
      %17 = sbr.rel (%p15) target = $region8
    $region5: #{tpu_custom_call.1} parent=1 // loop_body
      %s19 = ssub.s32 %s14, 1
      %s20 = ssub.s32 %s14, 2
      %s27 = sadd.s32 1, %s22
      %p28 = scmp.ge.s32.totalorder %s27, 1
      %s29 = scalar_select %p28, 0, %s27
      %s30 = sadd.s32 1, %s21
      %s31 = scalar_select %p28, %s30, %s21
      %p32 = scmp.ge.s32.totalorder %s31, 2
      %s33 = scalar_select %p32, 0, %s31
      %s34 = ssub.s32 %s21, %s33
      %s35 = ssub.s32 %s22, %s29
      %s36 = sor.u32 %s34, %s35
      %p37 = scmp.eq.s32.totalorder %s36, 0
      %s39 = sadd.s32 %s38, 1
      %s40 = scalar_select %p37, %s38, %s39
      %p43 = pneg %p37
      %p44 = scmp.eq.s32.totalorder %s14, 1
      %p45 = por %p43, %p44
      %p46 = scmp.ne.s32.totalorder %s38, %s41
      %p47 = scmp.eq.s32.totalorder %s14, 0
      %p48 = por %p46, %p47
      %p49 = scmp.ne.s32.totalorder %s38, %s41
      %p50 = scmp.eq.s32.totalorder %s19, 1
      %p51 = por %p49, %p50
      %p52 = scmp.ne.s32.totalorder %s41, %s42
      %p53 = scmp.eq.s32.totalorder %s19, 0
      %p54 = por %p52, %p53
      %p55 = scmp.ne.s32.totalorder %s41, %s42
      %p56 = scmp.eq.s32.totalorder %s20, 1
      %p57 = por %p55, %p56
      %p59 = scmp.ne.s32.totalorder %s42, %s58
      %p60 = scmp.eq.s32.totalorder %s20, 0
      %p61 = por %p59, %p60
      %s63 = sadd.s32 %s62, 1
      %p66 = scmp.eq.s32.totalorder %s14, 1
      %p67 = scmp.ne.s32.totalorder %s62, %s64
      %p68 = scmp.eq.s32.totalorder %s14, 0
      %p69 = por %p67, %p68
      %p70 = scmp.ne.s32.totalorder %s62, %s64
      %p71 = scmp.eq.s32.totalorder %s19, 1
      %p72 = por %p70, %p71
      %p73 = scmp.ne.s32.totalorder %s64, %s65
      %p74 = scmp.eq.s32.totalorder %s19, 0
      %p75 = por %p73, %p74
      %p76 = scmp.ne.s32.totalorder %s64, %s65
      %p77 = scmp.eq.s32.totalorder %s20, 1
      %p78 = por %p76, %p77
      %p80 = scmp.ne.s32.totalorder %s65, %s79
      %p81 = scmp.eq.s32.totalorder %s20, 0
      %p82 = por %p80, %p81
      %s83 = ssub.s32 %s21, %s33
      %s84 = ssub.s32 %s22, %s29
      %s85 = sor.u32 %s83, %s84
      %p86 = scmp.eq.s32.totalorder %s85, 0
      %s88 = sadd.s32 %s87, 1
      %s89 = scalar_select %p86, %s87, %s88
      %p92 = pneg %p86
      %p93 = scmp.eq.s32.totalorder %s14, 1
      %p94 = por %p92, %p93
      %p95 = scmp.ne.s32.totalorder %s87, %s90
      %p96 = scmp.eq.s32.totalorder %s14, 0
      %p97 = por %p95, %p96
      %p98 = scmp.ne.s32.totalorder %s87, %s90
      %p99 = scmp.eq.s32.totalorder %s19, 1
      %p100 = por %p98, %p99
      %p101 = scmp.ne.s32.totalorder %s90, %s91
      %p102 = scmp.eq.s32.totalorder %s19, 0
      %p103 = por %p101, %p102
      %p104 = scmp.ne.s32.totalorder %s90, %s91
      %p105 = scmp.eq.s32.totalorder %s20, 1
      %p106 = por %p104, %p105
      %p108 = scmp.ne.s32.totalorder %s91, %s107
      %p109 = scmp.eq.s32.totalorder %s20, 0
      %p110 = por %p108, %p109
      %s111 = ssub.s32 %s21, %s33
      %s112 = ssub.s32 %s22, %s29
      %s113 = sor.u32 %s111, %s112
      %p114 = scmp.eq.s32.totalorder %s113, 0
      %s116 = sadd.s32 %s115, 1
      %s117 = scalar_select %p114, %s115, %s116
      %p120 = pneg %p114
      %p121 = scmp.eq.s32.totalorder %s14, 1
      %p122 = por %p120, %p121
      %p123 = scmp.ne.s32.totalorder %s115, %s118
      %p124 = scmp.eq.s32.totalorder %s14, 0
      %p125 = por %p123, %p124
      %p126 = scmp.ne.s32.totalorder %s115, %s118
      %p127 = scmp.eq.s32.totalorder %s19, 1
      %p128 = por %p126, %p127
      %p129 = scmp.ne.s32.totalorder %s118, %s119
      %p130 = scmp.eq.s32.totalorder %s19, 0
      %p131 = por %p129, %p130
      %p132 = scmp.ne.s32.totalorder %s118, %s119
      %p133 = scmp.eq.s32.totalorder %s20, 1
      %p134 = por %p132, %p133
      %p136 = scmp.ne.s32.totalorder %s119, %s135
      %p137 = scmp.eq.s32.totalorder %s20, 0
      %p138 = por %p136, %p137
      %s139 = ssub.s32 %s21, %s33
      %s140 = ssub.s32 %s22, %s29
      %s141 = sor.u32 %s139, %s140
      %p142 = scmp.eq.s32.totalorder %s141, 0
      %s144 = sadd.s32 %s143, 1
      %s145 = scalar_select %p142, %s143, %s144
      %p148 = pneg %p142
      %p149 = scmp.eq.s32.totalorder %s14, 1
      %p150 = por %p148, %p149
      %p151 = scmp.ne.s32.totalorder %s143, %s146
      %p152 = scmp.eq.s32.totalorder %s14, 0
      %p153 = por %p151, %p152
      %p154 = scmp.ne.s32.totalorder %s143, %s146
      %p155 = scmp.eq.s32.totalorder %s19, 1
      %p156 = por %p154, %p155
      %p157 = scmp.ne.s32.totalorder %s146, %s147
      %p158 = scmp.eq.s32.totalorder %s19, 0
      %p159 = por %p157, %p158
      %p160 = scmp.ne.s32.totalorder %s146, %s147
      %p161 = scmp.eq.s32.totalorder %s20, 1
      %p162 = por %p160, %p161
      %p164 = scmp.ne.s32.totalorder %s147, %s163
      %p165 = scmp.eq.s32.totalorder %s20, 0
      %p166 = por %p164, %p165
      %p167 = scmp.le.s32.totalorder 1, %s14
      %p168 = scmp.lt.s32.totalorder %s14, 3
      %p169 = pnand %p167, %p168
      %p170 = pneg %p169
      // Predicated region
      $region9: #{tpu_custom_call.1} parent=5 // pred_check
        _
      $region10: #{tpu_custom_call.1} parent=5 // pred_check_branch
        %172 = sbr.rel (%p169) target = $region12
      $region11: #{tpu_custom_call.1} parent=5 // pred_region
        %s173 = ssub.s32 %s14, 1
        // Predicated region
        $region13: #{tpu_custom_call.1} parent=11 // pred_check
          %p174 = pneg %p75
        $region14: #{tpu_custom_call.1} parent=11 // pred_check_branch
          %176 = sbr.rel (%p174) target = $region16
        $region15: #{tpu_custom_call.1} parent=11 // pred_region
          _
        $region16: #{tpu_custom_call.1} parent=11 // pred_fallthru
          _
      $region12: #{tpu_custom_call.1} parent=5 // pred_fallthru
        _
      %p177 = scmp.lt.s32.totalorder %s14, 2
      // Predicated region
      $region17: #{tpu_custom_call.1} parent=5 // pred_check
        %p178 = pneg %p177
      $region18: #{tpu_custom_call.1} parent=5 // pred_check_branch
        %180 = sbr.rel (%p178) target = $region20
      $region19: #{tpu_custom_call.1} parent=5 // pred_region
        // Predicated region
        $region21: #{tpu_custom_call.1} parent=19 // pred_check
          %p181 = pneg %p48
        $region22: #{tpu_custom_call.1} parent=19 // pred_check_branch
          %183 = sbr.rel (%p181) target = $region24
        $region23: #{tpu_custom_call.1} parent=19 // pred_region
          %s184 = smul.u32 2, %s22
          %p185 = scmp.lt.s32.totalorder %s21, 1
          %s186 = scalar_select %p185, %s21, 1
          %p187 = scmp.lt.s32.totalorder %s184, 1
          %s188 = scalar_select %p187, %s184, 1
          %s189 = smul.addr %s186, 10
          %s190 = sadd.s32 %s188, %s189
          %s191 = smul.addr %s190, 8
          %s192 = scalar_lea.vmem %s0, %s191
          %s193 = smul.u32 2, %s22
        $region24: #{tpu_custom_call.1} parent=19 // pred_fallthru
          _
      $region20: #{tpu_custom_call.1} parent=5 // pred_fallthru
        _
      %p194 = scmp.le.s32.totalorder 1, %s14
      %p195 = scmp.lt.s32.totalorder %s14, 3
      %p196 = pnand %p194, %p195
      %p197 = pneg %p196
      // Predicated region
      $region25: #{tpu_custom_call.1} parent=5 // pred_check
        _
      $region26: #{tpu_custom_call.1} parent=5 // pred_check_branch
        %199 = sbr.rel (%p196) target = $region28
      $region27: #{tpu_custom_call.1} parent=5 // pred_region
        %s200 = ssub.s32 %s14, 1
        %s201 = smul.u32 2, %s24
        %p202 = scmp.lt.s32.totalorder %s23, 1
        %s203 = scalar_select %p202, %s23, 1
        %p204 = scmp.lt.s32.totalorder %s201, 1
        %s205 = scalar_select %p204, %s201, 1
        %s206 = smul.addr %s203, 10
        %s207 = sadd.s32 %s205, %s206
        %s208 = smul.addr %s207, 8
        %s209 = scalar_lea.vmem %s0, %s208
        %p210 = pneg %p54
        %p211 = pneg %p51
        %p212 = pneg %p75
        %p213 = pneg %p72
        %p214 = pneg %p103
        %p215 = pneg %p100
        %s216 = sand.u32 %s90, 1
        %s217 = scalar_lea.sflag [#allocation3], %s216
        %s218 = sand.u32 %s90, 1
        %s219 = smul.addr %s218, 16
        %s220 = scalar_lea.vmem [#allocation2], %s219
        %p221 = pneg %p131
        %p222 = pneg %p128
        %p223 = scmp.lt.s32.totalorder %s23, 1
        %s224 = scalar_select %p223, %s23, 1
        %p225 = scmp.lt.s32.totalorder %s24, 0
        %s226 = scalar_select %p225, %s24, 0
        %s227 = sadd.s32 %s226, %s224
        %s228 = smul.addr %s227, 8
        %s229 = scalar_lea.vmem %s3, %s228
        %p230 = pneg %p159
        %p231 = pneg %p156
        %p232 = scmp.lt.s32.totalorder %s23, 1
        %s233 = scalar_select %p232, %s23, 1
        %p234 = scmp.lt.s32.totalorder %s24, 0
        %s235 = scalar_select %p234, %s24, 0
        %s236 = sadd.s32 %s235, %s233
        %s237 = smul.addr %s236, 8
        %s238 = scalar_lea.vmem %s4, %s237
        %s239 = smul.u32 2, %s24
        %p240 = scmp.lt.s32.totalorder %s23, 1
        %s241 = scalar_select %p240, %s23, 1
        %p242 = scmp.lt.s32.totalorder %s239, 1
        %s243 = scalar_select %p242, %s239, 1
        %s244 = smul.addr %s241, 10
        %s245 = sadd.s32 %s243, %s244
        %s246 = smul.addr %s245, 8
        %s247 = scalar_lea.vmem %s0, %s246
        %s248 = smul.u32 2, %s24
        %s249 = smul.u32 2, %s24
        %p250 = scmp.lt.s32.totalorder %s23, 1
        %s251 = scalar_select %p250, %s23, 1
        %p252 = scmp.lt.s32.totalorder %s24, 0
        %s253 = scalar_select %p252, %s24, 0
        %s254 = sadd.s32 %s253, %s251
        %s255 = smul.addr %s254, 8
        %s256 = scalar_lea.vmem %s3, %s255
        %p257 = scmp.lt.s32.totalorder %s23, 1
        %s258 = scalar_select %p257, %s23, 1
        %p259 = scmp.lt.s32.totalorder %s24, 0
        %s260 = scalar_select %p259, %s24, 0
        %s261 = sadd.s32 %s260, %s258
        %s262 = smul.addr %s261, 8
        %s263 = scalar_lea.vmem %s4, %s262
        %v264 = vld [vmem:[%s1] sm:$0xff]
        %v265 = vld [vmem:[%s247] sm:$0xff]
        %v266 = vld [vmem:[%s247 + $0x8] sm:$0xff]
        %v267 = vld [vmem:[%s247 + $0x10] sm:$0xff]
        %v268 = vld [vmem:[%s247 + $0x18] sm:$0xff]
        %v269 = vld [vmem:[%s247 + $0x20] sm:$0xff]
        %v270 = vld [vmem:[%s247 + $0x28] sm:$0xff]
        %v271 = vld [vmem:[%s247 + $0x30] sm:$0xff]
        %v272 = vld [vmem:[%s247 + $0x38] sm:$0xff]
        %v273 = vld [vmem:[%s247 + $0x40] sm:$0xf]
        %v274 = vld [vmem:[%s247 + $0x48] sm:$0xf]
        %vm275 = vcmask 293888
        %v277 = vsel %vm275, %v264, 0
        %vm279 = vcmask 1043456
        %v281 = vsel %vm279, %v273, 0
        %v284 = vsel %vm279, %v274, 0
        %286 = vmatpush.msra.mxu0 0.0
        %287 = vmatpush.msra.mxu0 0.0
        %288 = vmatpush.msra.mxu0 0.0
        %289 = vmatpush.msra.mxu0 0.0
        %290 = vmatpush.msra.mxu0 0.0
        %291 = vmatpush.msra.mxu0 0.0
        %292 = vmatpush.msra.mxu0 0.0
        %293 = vmatpush.msra.mxu0 0.0
        %294 = vmatpush.msra.mxu0 0.0
        %295 = vmatpush.msra.mxu0 0.0
        %296 = vmatpush.msra.mxu0 0.0
        %297 = vmatpush.msra.mxu0 %v281
        %298 = vmatpush.msra.mxu0 %v271
        %299 = vmatpush.msra.mxu0 %v269
        %300 = vmatpush.msra.mxu0 %v267
        %301 = vmatpush.msra.mxu0 %v265
        %302 = vmatmul.f32.gmra.mxu0 %v277
        %v303 = vpop.f32.mrf.mxu0
        %v304 = vadd.f32 0.0, %v303
        %305 = vdwg.mxu0
        %306 = vmatpush.msra.mxu0 0.0
        %307 = vmatpush.msra.mxu0 0.0
        %308 = vmatpush.msra.mxu0 0.0
        %309 = vmatpush.msra.mxu0 0.0
        %310 = vmatpush.msra.mxu0 0.0
        %311 = vmatpush.msra.mxu0 0.0
        %312 = vmatpush.msra.mxu0 0.0
        %313 = vmatpush.msra.mxu0 0.0
        %314 = vmatpush.msra.mxu0 0.0
        %315 = vmatpush.msra.mxu0 0.0
        %316 = vmatpush.msra.mxu0 0.0
        %317 = vmatpush.msra.mxu0 %v284
        %318 = vmatpush.msra.mxu0 %v272
        %319 = vmatpush.msra.mxu0 %v270
        %320 = vmatpush.msra.mxu0 %v268
        %321 = vmatpush.msra.mxu0 %v266
        %322 = vmatmul.f32.gmra.mxu0 %v277
        %v323 = vpop.f32.mrf.mxu0
        %v324 = vadd.f32 0.0, %v323
        %325 = vdwg.mxu0
        %326 = vst [vmem:[%s220] sm:$0xff] %v304
        %327 = vst [vmem:[%s220 + $0x8] sm:$0xff] %v324
        %v328 = vadd.f32 %v304, %v324
        %329 = vadd.xlane.f32.xlu0 %v328
        %v330 = vpop.xlane.xlu0 %329
        %vm331 = vcmask 7168
        %332 = vst.msk [vmem:[%s256] sm:$0xff] %vm331, %v330
        %v333 = vmul.f32 %v304, %v304
        %v334 = vmul.f32 %v324, %v324
        %v335 = vadd.f32 %v333, %v334
        %336 = vadd.xlane.f32.xlu0 %v335
        %v337 = vpop.xlane.xlu0 %336
        %338 = vst.msk [vmem:[%s263] sm:$0xff] %vm331, %v337
        %s339 = sand.u32 %s90, 1
        %s340 = scalar_lea.sflag [#allocation3], %s339
        %s341 = sand.u32 %s90, 1
        %s342 = smul.addr %s341, 16
        %s343 = scalar_lea.vmem [#allocation2], %s342
        %p344 = scmp.lt.s32.totalorder %s23, 1
        %s345 = scalar_select %p344, %s23, 1
        %p346 = scmp.lt.s32.totalorder %s24, 0
        %s347 = scalar_select %p346, %s24, 0
        %s348 = sadd.s32 %s347, %s345
        %s349 = smul.addr %s348, 8
        %s350 = scalar_lea.vmem %s3, %s349
        %p351 = scmp.lt.s32.totalorder %s23, 1
        %s352 = scalar_select %p351, %s23, 1
        %p353 = scmp.lt.s32.totalorder %s24, 0
        %s354 = scalar_select %p353, %s24, 0
        %s355 = sadd.s32 %s354, %s352
        %s356 = smul.addr %s355, 8
        %s357 = scalar_lea.vmem %s4, %s356
        // Predicated region
        $region29: #{tpu_custom_call.1} parent=27 // pred_check
          %p358 = pneg %p100
        $region30: #{tpu_custom_call.1} parent=27 // pred_check_branch
          %360 = sbr.rel (%p358) target = $region32
        $region31: #{tpu_custom_call.1} parent=27 // pred_region
          %s361 = smul.u32 2, %s24
          %363 = vsyncadd %s340, 0
          %s364 = smul.addr %s23, 2
          %s365 = sadd.s32 %s361, %s364
          %s366 = smul.addr %s365, 8
          %s367 = scalar_lea.hbm %s2, %s366
          %s369 = sshll.u32 %s343, 4
          %s370 = int_to_ptr.vmem [resolvable:$true] %s369
          %s371 = sshll.u32 %s367, 4
          %s372 = int_to_ptr.hbm [resolvable:$true] %s371
          %374 = dma.vmem_to_hbm [thread:$0]  %s370, 256, %s372, %s340
        $region32: #{tpu_custom_call.1} parent=27 // pred_fallthru
          _
        // Predicated region
        $region33: #{tpu_custom_call.1} parent=27 // pred_check
          %p375 = pneg %p128
        $region34: #{tpu_custom_call.1} parent=27 // pred_check_branch
          %377 = sbr.rel (%p375) target = $region36
        $region35: #{tpu_custom_call.1} parent=27 // pred_region
          _
        $region36: #{tpu_custom_call.1} parent=27 // pred_fallthru
          _
        // Predicated region
        $region37: #{tpu_custom_call.1} parent=27 // pred_check
          %p378 = pneg %p156
        $region38: #{tpu_custom_call.1} parent=27 // pred_check_branch
          %380 = sbr.rel (%p378) target = $region40
        $region39: #{tpu_custom_call.1} parent=27 // pred_region
          _
        $region40: #{tpu_custom_call.1} parent=27 // pred_fallthru
          _
      $region28: #{tpu_custom_call.1} parent=5 // pred_fallthru
        _
      %p381 = scmp.le.s32.totalorder 2, %s14
      // Predicated region
      $region41: #{tpu_custom_call.1} parent=5 // pred_check
        %p382 = pneg %p381
      $region42: #{tpu_custom_call.1} parent=5 // pred_check_branch
        %384 = sbr.rel (%p382) target = $region44
      $region43: #{tpu_custom_call.1} parent=5 // pred_region
        %s385 = ssub.s32 %s14, 2
        // Predicated region
        $region45: #{tpu_custom_call.1} parent=43 // pred_check
          %p386 = pneg %p106
        $region46: #{tpu_custom_call.1} parent=43 // pred_check_branch
          %388 = sbr.rel (%p386) target = $region48
        $region47: #{tpu_custom_call.1} parent=43 // pred_region
          %s389 = sand.u32 %s91, 1
          %s390 = scalar_lea.sflag [#allocation3], %s389
          %s391 = sand.u32 %s91, 1
          %s392 = smul.addr %s391, 16
          %s393 = scalar_lea.vmem [#allocation2], %s392
          %395 = dma.done %s390, 256
        $region48: #{tpu_custom_call.1} parent=43 // pred_fallthru
          _
        // Predicated region
        $region49: #{tpu_custom_call.1} parent=43 // pred_check
          %p396 = pneg %p134
        $region50: #{tpu_custom_call.1} parent=43 // pred_check_branch
          %398 = sbr.rel (%p396) target = $region52
        $region51: #{tpu_custom_call.1} parent=43 // pred_region
          %p399 = scmp.lt.s32.totalorder %s25, 1
          %s400 = scalar_select %p399, %s25, 1
          %p401 = scmp.lt.s32.totalorder %s26, 0
          %s402 = scalar_select %p401, %s26, 0
          %s403 = sadd.s32 %s402, %s400
          %s404 = smul.addr %s403, 8
          %s405 = scalar_lea.vmem %s3, %s404
        $region52: #{tpu_custom_call.1} parent=43 // pred_fallthru
          _
        // Predicated region
        $region53: #{tpu_custom_call.1} parent=43 // pred_check
          %p406 = pneg %p162
        $region54: #{tpu_custom_call.1} parent=43 // pred_check_branch
          %408 = sbr.rel (%p406) target = $region56
        $region55: #{tpu_custom_call.1} parent=43 // pred_region
          %p409 = scmp.lt.s32.totalorder %s25, 1
          %s410 = scalar_select %p409, %s25, 1
          %p411 = scmp.lt.s32.totalorder %s26, 0
          %s412 = scalar_select %p411, %s26, 0
          %s413 = sadd.s32 %s412, %s410
          %s414 = smul.addr %s413, 8
          %s415 = scalar_lea.vmem %s4, %s414
        $region56: #{tpu_custom_call.1} parent=43 // pred_fallthru
          _
      $region44: #{tpu_custom_call.1} parent=5 // pred_fallthru
        _
    $region6: #{tpu_custom_call.1} parent=1 // loop_footer
      %s18 = sadd.s32 1, %s14
    $region7: #{tpu_custom_call.1} parent=1 // loop_footer_branch
      %13 = sbr.rel target = $region3
    $region8: #{tpu_custom_call.1} parent=1 // loop_exit
      _
    %416 = vsyncpa [#allocation3], 1
    %s417 = scalar_lea.sflag [#allocation3], 1
    %418 = vsyncpa %s417, 1

</llo_original>
